<compile_context>
chip_gen: v6e
topology: v6e:2x2x1
jax: 0.10.0
libtpu: 0.0.40
codegen_flags: <defaults>
</compile_context>

<pallas_src>
import jax
import jax.numpy as jnp
from jax.experimental import pallas as pl
from jax.experimental.pallas import tpu as pltpu


def _conv1x1_kernel(x_ref, w_ref, b_ref, o_ref):
    # x_ref: (1, C, T)      input pixels, channels on the sublane axis
    # w_ref: (P+1, C)       BN-folded 1x1 conv weight
    # b_ref: (P+1, 1)       BN-folded conv bias
    # o_ref: (1, P+1, T)    output tile (lane-dense, T multiple of 128)
    x = x_ref[0]                                                    # (C, T)
    y = jnp.dot(w_ref[...], x, preferred_element_type=jnp.float32)  # (P+1, T)
    o_ref[0] = (y + b_ref[...]).astype(o_ref.dtype)


def _round_up(x, m):
    return (x + m - 1) // m * m


def pixel_to_part_classifier(x_nchw, params, *, t_hw=2048):
    """Forward pass equivalent to PixelToPartClassifier.forward (eval-mode BN).

    x_nchw: (N, C, H, W) float32
    params: dict with bn_gamma, bn_beta, bn_mean, bn_var, bn_eps,
            conv_w (P+1, C, 1, 1), conv_b (P+1,)
    returns: (N, P+1, H, W) float32
    """
    N, C, H, W = x_nchw.shape
    HW = H * W
    conv_w = params["conv_w"]          # (P+1, C, 1, 1)
    conv_b = params["conv_b"]          # (P+1,)
    Pp1 = conv_w.shape[0]

    # --- Fold BatchNorm (inference) into the conv weight/bias (plain JAX glue).
    inv_std = 1.0 / jnp.sqrt(params["bn_var"].astype(jnp.float32) + params["bn_eps"])
    scale = params["bn_gamma"].astype(jnp.float32) * inv_std                 # (C,)
    shift = params["bn_beta"].astype(jnp.float32) - params["bn_mean"].astype(jnp.float32) * scale
    w2d = conv_w.reshape(Pp1, C).astype(jnp.float32)                         # (P+1, C)
    w_fold = w2d * scale[None, :]                                            # (P+1, C)
    b_fold = (conv_b.astype(jnp.float32) + w2d @ shift).reshape(Pp1, 1)      # (P+1, 1)

    # --- NCHW is already contiguous as (N, C, H*W); no transpose needed.
    x3 = x_nchw.reshape(N, C, HW).astype(jnp.float32)

    # Tile the HW axis lane-dense; pad to a multiple of the tile if ragged.
    t = min(t_hw, _round_up(HW, 128))
    hw_pad = _round_up(HW, t)
    if hw_pad != HW:
        x3 = jnp.pad(x3, ((0, 0), (0, 0), (0, hw_pad - HW)))

    grid = (N, hw_pad // t)

    cost = pl.CostEstimate(
        flops=2 * N * hw_pad * C * Pp1,
        transcendentals=0,
        bytes_accessed=4 * (N * C * hw_pad + N * Pp1 * hw_pad + Pp1 * C + Pp1),
    )

    out3 = pl.pallas_call(
        _conv1x1_kernel,
        out_shape=jax.ShapeDtypeStruct((N, Pp1, hw_pad), jnp.float32),
        grid_spec=pltpu.PrefetchScalarGridSpec(
            num_scalar_prefetch=0,
            grid=grid,
            in_specs=[
                pl.BlockSpec((1, C, t), lambda n, j: (n, 0, j)),    # x tile
                pl.BlockSpec((Pp1, C), lambda n, j: (0, 0)),        # folded weight
                pl.BlockSpec((Pp1, 1), lambda n, j: (0, 0)),        # folded bias
            ],
            out_specs=pl.BlockSpec((1, Pp1, t), lambda n, j: (n, 0, j)),
        ),
        compiler_params=pltpu.CompilerParams(
            dimension_semantics=("parallel", "parallel")),
        cost_estimate=cost,
    )(x3, w_fold, b_fold)

    out3 = out3[:, :, :HW]
    return out3.reshape(N, Pp1, H, W)


def init_params(key, dim_reduce_output, parts_num):
    # Mirrors PixelToPartClassifier._init_params:
    #   BN weight=1, bias=0 (fresh BN: running_mean=0, running_var=1, eps=1e-5)
    #   Conv weight ~ N(0, std=0.001), bias = 0
    C = dim_reduce_output
    Pp1 = parts_num + 1
    conv_w = 0.001 * jax.random.normal(key, (Pp1, C, 1, 1), dtype=jnp.float32)
    return dict(
        bn_gamma=jnp.ones((C,), jnp.float32),
        bn_beta=jnp.zeros((C,), jnp.float32),
        bn_mean=jnp.zeros((C,), jnp.float32),
        bn_var=jnp.ones((C,), jnp.float32),
        bn_eps=jnp.float32(1e-5),
        conv_w=conv_w,
        conv_b=jnp.zeros((Pp1,), jnp.float32),
    )


if __name__ == "__main__":
    # Small, module-consistent shapes: dim_reduce_output=32 channels,
    # parts_num=5 -> 6 output channels, batch=2, 16x16 feature map.
    N, C, H, W = 2, 32, 16, 16
    parts_num = 5

    key = jax.random.PRNGKey(0)
    k_x, k_w = jax.random.split(key)
    x = jax.random.normal(k_x, (N, C, H, W), dtype=jnp.float32)
    params = init_params(k_w, dim_reduce_output=C, parts_num=parts_num)

    out = pixel_to_part_classifier(x, params)
    out = jax.block_until_ready(out)

    # Sanity check against a plain-JAX reference (BN eval + 1x1 conv).
    inv_std = 1.0 / jnp.sqrt(params["bn_var"] + params["bn_eps"])
    xn = (x - params["bn_mean"][None, :, None, None]) * inv_std[None, :, None, None]
    xn = xn * params["bn_gamma"][None, :, None, None] + params["bn_beta"][None, :, None, None]
    w2d = params["conv_w"].reshape(parts_num + 1, C)
    ref = jnp.einsum("nchw,pc->nphw", xn, w2d) + params["conv_b"][None, :, None, None]
    assert out.shape == (N, parts_num + 1, H, W)
    assert jnp.max(jnp.abs(out - ref)) < 1e-4

    print("KERNEL_OK")
</pallas_src>

<mosaic_0001>
module attributes {stable_mosaic.version = 11 : i64} {
  func.func @_conv1x1_kernel(%arg0: i32, %arg1: i32, %arg2: memref<1x32x256xf32, #tpu.memory_space<vmem>>, %arg3: memref<6x32xf32, #tpu.memory_space<vmem>>, %arg4: memref<6x1xf32, #tpu.memory_space<vmem>>, %arg5: memref<1x6x256xf32, #tpu.memory_space<vmem>>) attributes {dimension_semantics = [#tpu.dimension_semantics<parallel>, #tpu.dimension_semantics<parallel>], iteration_bounds = array<i64: 2, 1>, scalar_prefetch = 0 : i64, scratch_operands = 0 : i64, tpu.core_type = #tpu.core_type<tc>, window_params = [{transform_indices = @transform_0, window_bounds = array<i64: 1, 32, 256>}, {pipeline_mode = #tpu.pipeline_mode<synchronous>, transform_indices = @transform_1, window_bounds = array<i64: 6, 32>}, {pipeline_mode = #tpu.pipeline_mode<synchronous>, transform_indices = @transform_2, window_bounds = array<i64: 6, 1>}, {transform_indices = @transform_3, window_bounds = array<i64: 1, 6, 256>}]} {
    %c0 = arith.constant 0 : index
    %c0_0 = arith.constant 0 : index
    %c0_1 = arith.constant 0 : index
    %0 = vector.load %arg2[%c0, %c0_0, %c0_1] : memref<1x32x256xf32, #tpu.memory_space<vmem>>, vector<1x32x256xf32>
    %1 = vector.shape_cast %0 : vector<1x32x256xf32> to vector<32x256xf32>
    %c0_2 = arith.constant 0 : index
    %c0_3 = arith.constant 0 : index
    %2 = vector.load %arg3[%c0_2, %c0_3] : memref<6x32xf32, #tpu.memory_space<vmem>>, vector<6x32xf32>
    %cst = arith.constant dense<0.000000e+00> : vector<6x256xf32>
    %3 = tpu.matmul %2, %1, %cst {dimension_numbers = #tpu.dot_dimension_numbers<[1], [0], [0], [1], [0, 0, 1, 1], [], []>} : vector<6x32xf32>, vector<32x256xf32>, vector<6x256xf32> -> vector<6x256xf32>
    %c0_4 = arith.constant 0 : index
    %c0_5 = arith.constant 0 : index
    %4 = vector.load %arg4[%c0_4, %c0_5] : memref<6x1xf32, #tpu.memory_space<vmem>>, vector<6x1xf32>
    %5 = vector.broadcast %4 : vector<6x1xf32> to vector<6x256xf32>
    %6 = arith.addf %3, %5 : vector<6x256xf32>
    %c0_6 = arith.constant 0 : index
    %c0_7 = arith.constant 0 : index
    %c0_8 = arith.constant 0 : index
    %7 = vector.load %arg5[%c0_6, %c0_7, %c0_8] : memref<1x6x256xf32, #tpu.memory_space<vmem>>, vector<1x6x256xf32>
    %8 = vector.shape_cast %7 : vector<1x6x256xf32> to vector<6x256xf32>
    %9 = vector.shape_cast %6 : vector<6x256xf32> to vector<1x6x256xf32>
    tpu.vector_store %arg5[%c0_6, %c0_7, %c0_8], %9 {strides = array<i32>} : memref<1x6x256xf32, #tpu.memory_space<vmem>>, vector<1x6x256xf32>,
    return
  }
  func.func @transform_0(%arg0: i32, %arg1: i32) -> (i32, i32, i32) {
    %c0_i32 = arith.constant 0 : i32
    %c0_i32_0 = arith.constant 0 : i32
    return %arg0, %c0_i32, %arg1 : i32, i32, i32
  }
  func.func @transform_1(%arg0: i32, %arg1: i32) -> (i32, i32) {
    %c0_i32 = arith.constant 0 : i32
    %c0_i32_0 = arith.constant 0 : i32
    %c0_i32_1 = arith.constant 0 : i32
    return %c0_i32, %c0_i32_0 : i32, i32
  }
  func.func @transform_2(%arg0: i32, %arg1: i32) -> (i32, i32) {
    %c0_i32 = arith.constant 0 : i32
    %c0_i32_0 = arith.constant 0 : i32
    %c0_i32_1 = arith.constant 0 : i32
    return %c0_i32, %c0_i32_0 : i32, i32
  }
  func.func @transform_3(%arg0: i32, %arg1: i32) -> (i32, i32, i32) {
    %c0_i32 = arith.constant 0 : i32
    %c0_i32_0 = arith.constant 0 : i32
    return %arg0, %c0_i32, %arg1 : i32, i32, i32
  }
}

</mosaic_0001>

<llo_original>
// kernel: tpu_custom_call.1
$region0: #{tpu_custom_call.1}
  #allocation0 [shape = 'u32[]', space=smem, size = 0x4, offset = 0x4, fixed_abs, tag = 'smem constant byte address 0x4 - core index']
  #allocation1 [shape = 'u32[144,128]{1,0:T(1,128)}', space=vmem, size = 0x12000, scoped, tag = 'internal scratch']
  %s0 = inlined_call_operand.hbm [shape: f32[2,32,256], index: 0, kind: input, shape index: {}]
  %s1 = inlined_call_operand.vmem [shape: f32[6,32], index: 1, kind: input, shape index: {}]
  %s2 = inlined_call_operand.vmem [shape: f32[6,1], index: 2, kind: input, shape index: {}]
  %s3 = inlined_call_operand.vmem [shape: f32[2,6,256], index: 3, kind: output, shape index: {}]
  %s4 = sld [smem:[#allocation0]]
  $region49: #{tpu_custom_call.1} parent=0
    _
  %s6 = ssub.s32 1, %s4
  %s7 = scalar_select 0, %s6, %s4
  $region1: #{tpu_custom_call.1} parent=0
    #allocation2 [shape = 'u8[65536]{0}', space=vmem, size = 0x10000, scoped, tag = 'input window, operand 0']
    #allocation3 [shape = 's32[2]{0}', space=sflag, size = 0x8, scoped, tag = 'scoped memory for tpu_custom_call.1']
    %8 = vsyncpa [#allocation3], 0
    %s9 = scalar_lea.sflag [#allocation3], 1
    %10 = vsyncpa %s9, 0
    loop: start=0, step=1, limit=4
    $region2: #{tpu_custom_call.1} parent=1 // loop_pre_header
      _
    $region3: #{tpu_custom_call.1} parent=1 // loop_header
      %s12 = sphi 0, %s16
      %p13 = scmp.ge.s32.totalorder %s12, 4
      %s19 = sphi 0, %s31
      %s20 = sphi 0, %s27
      %s21 = sphi 0, %s19
      %s22 = sphi 0, %s20
      %s23 = sphi 0, %s21
      %s24 = sphi 0, %s22
      %s36 = sphi 0, %s38
      %s39 = sphi 0, %s36
      %s40 = sphi 0, %s39
      %s56 = sphi 0, %s40
      %s60 = sphi 0, %s60
      %s62 = sphi 0, %s60
      %s63 = sphi 0, %s62
      %s77 = sphi 0, %s63
      %s81 = sphi 0, %s81
      %s83 = sphi 0, %s81
      %s84 = sphi 0, %s83
      %s98 = sphi 0, %s84
      %s106 = sphi 0, %s108
      %s109 = sphi 0, %s106
      %s110 = sphi 0, %s109
      %s126 = sphi 0, %s110
    $region4: #{tpu_custom_call.1} parent=1 // loop_header_branch
      %15 = sbr.rel (%p13) target = $region8
    $region5: #{tpu_custom_call.1} parent=1 // loop_body
      %s17 = ssub.s32 %s12, 1
      %s18 = ssub.s32 %s12, 2
      %s25 = sadd.s32 1, %s20
      %p26 = scmp.ge.s32.totalorder %s25, 1
      %s27 = scalar_select %p26, 0, %s25
      %s28 = sadd.s32 1, %s19
      %s29 = scalar_select %p26, %s28, %s19
      %p30 = scmp.ge.s32.totalorder %s29, 2
      %s31 = scalar_select %p30, 0, %s29
      %s32 = ssub.s32 %s19, %s31
      %s33 = ssub.s32 %s20, %s27
      %s34 = sor.u32 %s32, %s33
      %p35 = scmp.eq.s32.totalorder %s34, 0
      %s37 = sadd.s32 %s36, 1
      %s38 = scalar_select %p35, %s36, %s37
      %p41 = pneg %p35
      %p42 = scmp.eq.s32.totalorder %s12, 1
      %p43 = por %p41, %p42
      %p44 = scmp.ne.s32.totalorder %s36, %s39
      %p45 = scmp.eq.s32.totalorder %s12, 0
      %p46 = por %p44, %p45
      %p47 = scmp.ne.s32.totalorder %s36, %s39
      %p48 = scmp.eq.s32.totalorder %s17, 1
      %p49 = por %p47, %p48
      %p50 = scmp.ne.s32.totalorder %s39, %s40
      %p51 = scmp.eq.s32.totalorder %s17, 0
      %p52 = por %p50, %p51
      %p53 = scmp.ne.s32.totalorder %s39, %s40
      %p54 = scmp.eq.s32.totalorder %s18, 1
      %p55 = por %p53, %p54
      %p57 = scmp.ne.s32.totalorder %s40, %s56
      %p58 = scmp.eq.s32.totalorder %s18, 0
      %p59 = por %p57, %p58
      %s61 = sadd.s32 %s60, 1
      %p64 = scmp.eq.s32.totalorder %s12, 1
      %p65 = scmp.ne.s32.totalorder %s60, %s62
      %p66 = scmp.eq.s32.totalorder %s12, 0
      %p67 = por %p65, %p66
      %p68 = scmp.ne.s32.totalorder %s60, %s62
      %p69 = scmp.eq.s32.totalorder %s17, 1
      %p70 = por %p68, %p69
      %p71 = scmp.ne.s32.totalorder %s62, %s63
      %p72 = scmp.eq.s32.totalorder %s17, 0
      %p73 = por %p71, %p72
      %p74 = scmp.ne.s32.totalorder %s62, %s63
      %p75 = scmp.eq.s32.totalorder %s18, 1
      %p76 = por %p74, %p75
      %p78 = scmp.ne.s32.totalorder %s63, %s77
      %p79 = scmp.eq.s32.totalorder %s18, 0
      %p80 = por %p78, %p79
      %s82 = sadd.s32 %s81, 1
      %p85 = scmp.eq.s32.totalorder %s12, 1
      %p86 = scmp.ne.s32.totalorder %s81, %s83
      %p87 = scmp.eq.s32.totalorder %s12, 0
      %p88 = por %p86, %p87
      %p89 = scmp.ne.s32.totalorder %s81, %s83
      %p90 = scmp.eq.s32.totalorder %s17, 1
      %p91 = por %p89, %p90
      %p92 = scmp.ne.s32.totalorder %s83, %s84
      %p93 = scmp.eq.s32.totalorder %s17, 0
      %p94 = por %p92, %p93
      %p95 = scmp.ne.s32.totalorder %s83, %s84
      %p96 = scmp.eq.s32.totalorder %s18, 1
      %p97 = por %p95, %p96
      %p99 = scmp.ne.s32.totalorder %s84, %s98
      %p100 = scmp.eq.s32.totalorder %s18, 0
      %p101 = por %p99, %p100
      %s102 = ssub.s32 %s19, %s31
      %s103 = ssub.s32 %s20, %s27
      %s104 = sor.u32 %s102, %s103
      %p105 = scmp.eq.s32.totalorder %s104, 0
      %s107 = sadd.s32 %s106, 1
      %s108 = scalar_select %p105, %s106, %s107
      %p111 = pneg %p105
      %p112 = scmp.eq.s32.totalorder %s12, 1
      %p113 = por %p111, %p112
      %p114 = scmp.ne.s32.totalorder %s106, %s109
      %p115 = scmp.eq.s32.totalorder %s12, 0
      %p116 = por %p114, %p115
      %p117 = scmp.ne.s32.totalorder %s106, %s109
      %p118 = scmp.eq.s32.totalorder %s17, 1
      %p119 = por %p117, %p118
      %p120 = scmp.ne.s32.totalorder %s109, %s110
      %p121 = scmp.eq.s32.totalorder %s17, 0
      %p122 = por %p120, %p121
      %p123 = scmp.ne.s32.totalorder %s109, %s110
      %p124 = scmp.eq.s32.totalorder %s18, 1
      %p125 = por %p123, %p124
      %p127 = scmp.ne.s32.totalorder %s110, %s126
      %p128 = scmp.eq.s32.totalorder %s18, 0
      %p129 = por %p127, %p128
      %p130 = scmp.le.s32.totalorder 1, %s12
      %p131 = scmp.lt.s32.totalorder %s12, 3
      %p132 = pnand %p130, %p131
      %p133 = pneg %p132
      // Predicated region
      $region9: #{tpu_custom_call.1} parent=5 // pred_check
        _
      $region10: #{tpu_custom_call.1} parent=5 // pred_check_branch
        %135 = sbr.rel (%p132) target = $region12
      $region11: #{tpu_custom_call.1} parent=5 // pred_region
        %s136 = ssub.s32 %s12, 1
        // Predicated region
        $region13: #{tpu_custom_call.1} parent=11 // pred_check
          %p137 = pneg %p73
        $region14: #{tpu_custom_call.1} parent=11 // pred_check_branch
          %139 = sbr.rel (%p137) target = $region16
        $region15: #{tpu_custom_call.1} parent=11 // pred_region
          _
        $region16: #{tpu_custom_call.1} parent=11 // pred_fallthru
          _
        // Predicated region
        $region17: #{tpu_custom_call.1} parent=11 // pred_check
          %p140 = pneg %p94
        $region18: #{tpu_custom_call.1} parent=11 // pred_check_branch
          %142 = sbr.rel (%p140) target = $region20
        $region19: #{tpu_custom_call.1} parent=11 // pred_region
          _
        $region20: #{tpu_custom_call.1} parent=11 // pred_fallthru
          _
      $region12: #{tpu_custom_call.1} parent=5 // pred_fallthru
        _
      %p143 = scmp.lt.s32.totalorder %s12, 2
      // Predicated region
      $region21: #{tpu_custom_call.1} parent=5 // pred_check
        %p144 = pneg %p143
      $region22: #{tpu_custom_call.1} parent=5 // pred_check_branch
        %146 = sbr.rel (%p144) target = $region24
      $region23: #{tpu_custom_call.1} parent=5 // pred_region
        // Predicated region
        $region25: #{tpu_custom_call.1} parent=23 // pred_check
          %p147 = pneg %p46
        $region26: #{tpu_custom_call.1} parent=23 // pred_check_branch
          %149 = sbr.rel (%p147) target = $region28
        $region27: #{tpu_custom_call.1} parent=23 // pred_region
          %s150 = sand.u32 %s36, 1
          %s151 = scalar_lea.sflag [#allocation3], %s150
          %s152 = sand.u32 %s36, 1
          %s153 = smul.addr %s152, 64
          %s154 = scalar_lea.vmem [#allocation2], %s153
          %s155 = smul.u32 2, %s20
          %s157 = ssub.s32 1024, 1024
          %158 = vsyncadd %s151, %s157
          %s159 = smul.addr %s19, 8
          %s160 = sadd.s32 %s155, %s159
          %s161 = smul.addr %s160, 128
          %s162 = scalar_lea.hbm %s0, %s161
          %s163 = sshll.u32 %s154, 4
          %s164 = int_to_ptr.vmem [resolvable:$true] %s163
          %169 = dma.hbm_to_vmem [thread:$0]  %s162, 1024, %s164, %s151, 256, 256, 16
        $region28: #{tpu_custom_call.1} parent=23 // pred_fallthru
          _
      $region24: #{tpu_custom_call.1} parent=5 // pred_fallthru
        _
      %p170 = scmp.le.s32.totalorder 1, %s12
      %p171 = scmp.lt.s32.totalorder %s12, 3
      %p172 = pnand %p170, %p171
      %p173 = pneg %p172
      // Predicated region
      $region29: #{tpu_custom_call.1} parent=5 // pred_check
        _
      $region30: #{tpu_custom_call.1} parent=5 // pred_check_branch
        %175 = sbr.rel (%p172) target = $region32
      $region31: #{tpu_custom_call.1} parent=5 // pred_region
        %s176 = ssub.s32 %s12, 1
        %s177 = sand.u32 %s39, 1
        %s178 = scalar_lea.sflag [#allocation3], %s177
        %s179 = sand.u32 %s39, 1
        %s180 = smul.addr %s179, 64
        %s181 = scalar_lea.vmem [#allocation2], %s180
        // Predicated region
        $region33: #{tpu_custom_call.1} parent=31 // pred_check
          %p182 = pneg %p52
        $region34: #{tpu_custom_call.1} parent=31 // pred_check_branch
          %184 = sbr.rel (%p182) target = $region36
        $region35: #{tpu_custom_call.1} parent=31 // pred_region
          %185 = dma.done %s178, 1024
        $region36: #{tpu_custom_call.1} parent=31 // pred_fallthru
          _
        %s186 = sand.u32 %s39, 1
        %s187 = scalar_lea.sflag [#allocation3], %s186
        %s188 = sand.u32 %s39, 1
        %s189 = smul.addr %s188, 64
        %s190 = scalar_lea.vmem [#allocation2], %s189
        %p191 = pneg %p52
        %p192 = pneg %p49
        %p193 = pneg %p73
        %p194 = pneg %p70
        %p195 = pneg %p94
        %p196 = pneg %p91
        %p197 = pneg %p122
        %p198 = pneg %p119
        %s199 = smul.u32 2, %s22
        %p200 = scmp.lt.s32.totalorder %s21, 1
        %s201 = scalar_select %p200, %s21, 1
        %p202 = scmp.lt.s32.totalorder %s199, 1
        %s203 = scalar_select %p202, %s199, 1
        %s204 = smul.addr %s201, 2
        %s205 = sadd.s32 %s203, %s204
        %s206 = smul.addr %s205, 8
        %s207 = scalar_lea.vmem %s3, %s206
        %s208 = smul.u32 2, %s22
        %s209 = smul.u32 2, %s22
        %p210 = scmp.lt.s32.totalorder %s21, 1
        %s211 = scalar_select %p210, %s21, 1
        %p212 = scmp.lt.s32.totalorder %s209, 1
        %s213 = scalar_select %p212, %s209, 1
        %s214 = smul.addr %s211, 2
        %s215 = sadd.s32 %s213, %s214
        %s216 = smul.addr %s215, 8
        %s217 = scalar_lea.vmem %s3, %s216
        %s218 = smul.u32 2, %s22
        %v219 = vld [vmem:[%s181] sm:$0xff]
        %v220 = vld [vmem:[%s181 + $0x8] sm:$0xff]
        %v221 = vld [vmem:[%s181 + $0x10] sm:$0xff]
        %v222 = vld [vmem:[%s181 + $0x18] sm:$0xff]
        %v223 = vld [vmem:[%s181 + $0x20] sm:$0xff]
        %v224 = vld [vmem:[%s181 + $0x28] sm:$0xff]
        %v225 = vld [vmem:[%s181 + $0x30] sm:$0xff]
        %v226 = vld [vmem:[%s181 + $0x38] sm:$0xff]
        %v227 = vld [vmem:[%s1] sm:$0x3f]
        %v228 = vld [vmem:[%s2] sm:$0x3f]
        %230 = vset.pattern.permute.xlu0 0
        %231 = vperm.xlu0 %230, %v228
        %v232 = vpop.permute.xlu0 %231
        %vm234 = vcmask 261120
        %v236 = vsel %vm234, %v227, 0
        %238 = vmatprep.subr.mxu0 0.0
        %239 = vmatpush1.msra.mxu0 0.0
        %240 = vmatprep.subr.mxu0 0.0
        %241 = vmatpush1.msra.mxu0 0.0
        %242 = vmatprep.subr.mxu0 0.0
        %243 = vmatpush1.msra.mxu0 0.0
        %244 = vmatprep.subr.mxu0 0.0
        %245 = vmatpush1.msra.mxu0 0.0
        %246 = vmatprep.subr.mxu0 0.0
        %247 = vmatpush1.msra.mxu0 0.0
        %248 = vmatprep.subr.mxu0 0.0
        %249 = vmatpush1.msra.mxu0 0.0
        %250 = vmatprep.subr.mxu0 0.0
        %251 = vmatpush1.msra.mxu0 0.0
        %252 = vmatprep.subr.mxu0 0.0
        %253 = vmatpush1.msra.mxu0 0.0
        %254 = vmatprep.subr.mxu0 0.0
        %255 = vmatpush1.msra.mxu0 0.0
        %256 = vmatprep.subr.mxu0 0.0
        %257 = vmatpush1.msra.mxu0 0.0
        %258 = vmatprep.subr.mxu0 0.0
        %259 = vmatpush1.msra.mxu0 0.0
        %260 = vmatprep.subr.mxu0 0.0
        %261 = vmatpush1.msra.mxu0 0.0
        %262 = vmatprep.subr.mxu0 %v226
        %263 = vmatpush1.msra.mxu0 %v225
        %264 = vmatprep.subr.mxu0 %v224
        %265 = vmatpush1.msra.mxu0 %v223
        %266 = vmatprep.subr.mxu0 %v222
        %267 = vmatpush1.msra.mxu0 %v221
        %268 = vmatprep.subr.mxu0 %v220
        %269 = vmatpush1.msra.mxu0 %v219
        %270 = vmatprep.subr.mxu0 0.0
        %271 = vmatpush2.msra.mxu0 0.0
        %272 = vmatprep.subr.mxu0 0.0
        %273 = vmatpush2.msra.mxu0 0.0
        %274 = vmatprep.subr.mxu0 0.0
        %275 = vmatpush2.msra.mxu0 0.0
        %276 = vmatprep.subr.mxu0 0.0
        %277 = vmatpush2.msra.mxu0 0.0
        %278 = vmatprep.subr.mxu0 0.0
        %279 = vmatpush2.msra.mxu0 0.0
        %280 = vmatprep.subr.mxu0 0.0
        %281 = vmatpush2.msra.mxu0 0.0
        %282 = vmatprep.subr.mxu0 0.0
        %283 = vmatpush2.msra.mxu0 0.0
        %284 = vmatprep.subr.mxu0 0.0
        %285 = vmatpush2.msra.mxu0 0.0
        %286 = vmatprep.subr.mxu0 0.0
        %287 = vmatpush2.msra.mxu0 0.0
        %288 = vmatprep.subr.mxu0 0.0
        %289 = vmatpush2.msra.mxu0 0.0
        %290 = vmatprep.subr.mxu0 0.0
        %291 = vmatpush2.msra.mxu0 0.0
        %292 = vmatprep.subr.mxu0 0.0
        %293 = vmatpush2.msra.mxu0 0.0
        %294 = vmatprep.subr.mxu0 0.0
        %295 = vmatpush2.msra.mxu0 0.0
        %296 = vmatprep.subr.mxu0 0.0
        %297 = vmatpush2.msra.mxu0 0.0
        %298 = vmatprep.subr.mxu0 0.0
        %299 = vmatpush2.msra.mxu0 0.0
        %300 = vmatprep.subr.mxu0 0.0
        %301 = vmatpush2.msra.mxu0 0.0
        %302 = vmatprep.mubr.f32.mxu0 0.0
        %303 = vmatmul.mubr.f32.gmra.mxu0 %v236
        %v304 = vpop.f32.mrf.mxu0
        %v305 = vadd.f32 %v232, %v304
        %v306 = vpop.f32.mrf.mxu0
        %v307 = vadd.f32 %v232, %v306
        %308 = vdwg.mxu0
        %309 = vst [vmem:[%s217] sm:$0x3f] %v305
        %310 = vst [vmem:[%s217 + $0x8] sm:$0x3f] %v307
        %s311 = smul.u32 2, %s22
        %p312 = scmp.lt.s32.totalorder %s21, 1
        %s313 = scalar_select %p312, %s21, 1
        %p314 = scmp.lt.s32.totalorder %s311, 1
        %s315 = scalar_select %p314, %s311, 1
        %s316 = smul.addr %s313, 2
        %s317 = sadd.s32 %s315, %s316
        %s318 = smul.addr %s317, 8
        %s319 = scalar_lea.vmem %s3, %s318
        // Predicated region
        $region37: #{tpu_custom_call.1} parent=31 // pred_check
          %p320 = pneg %p119
        $region38: #{tpu_custom_call.1} parent=31 // pred_check_branch
          %322 = sbr.rel (%p320) target = $region40
        $region39: #{tpu_custom_call.1} parent=31 // pred_region
          %s323 = smul.u32 2, %s22
        $region40: #{tpu_custom_call.1} parent=31 // pred_fallthru
          _
      $region32: #{tpu_custom_call.1} parent=5 // pred_fallthru
        _
      %p324 = scmp.le.s32.totalorder 2, %s12
      // Predicated region
      $region41: #{tpu_custom_call.1} parent=5 // pred_check
        %p325 = pneg %p324
      $region42: #{tpu_custom_call.1} parent=5 // pred_check_branch
        %327 = sbr.rel (%p325) target = $region44
      $region43: #{tpu_custom_call.1} parent=5 // pred_region
        %s328 = ssub.s32 %s12, 2
        // Predicated region
        $region45: #{tpu_custom_call.1} parent=43 // pred_check
          %p329 = pneg %p125
        $region46: #{tpu_custom_call.1} parent=43 // pred_check_branch
          %331 = sbr.rel (%p329) target = $region48
        $region47: #{tpu_custom_call.1} parent=43 // pred_region
          %s332 = smul.u32 2, %s24
          %p333 = scmp.lt.s32.totalorder %s23, 1
          %s334 = scalar_select %p333, %s23, 1
          %p335 = scmp.lt.s32.totalorder %s332, 1
          %s336 = scalar_select %p335, %s332, 1
          %s337 = smul.addr %s334, 2
          %s338 = sadd.s32 %s336, %s337
          %s339 = smul.addr %s338, 8
          %s340 = scalar_lea.vmem %s3, %s339
        $region48: #{tpu_custom_call.1} parent=43 // pred_fallthru
          _
      $region44: #{tpu_custom_call.1} parent=5 // pred_fallthru
        _
    $region6: #{tpu_custom_call.1} parent=1 // loop_footer
      %s16 = sadd.s32 1, %s12
    $region7: #{tpu_custom_call.1} parent=1 // loop_footer_branch
      %11 = sbr.rel target = $region3
    $region8: #{tpu_custom_call.1} parent=1 // loop_exit
      _
    %341 = vsyncpa [#allocation3], 1
    %s342 = scalar_lea.sflag [#allocation3], 1
    %343 = vsyncpa %s342, 1

</llo_original>
